<compile_context>
chip_gen: v7x
topology: tpu7x:2x2x1
jax: 0.10.0
libtpu: 0.0.40
codegen_flags: <defaults>
</compile_context>

<pallas_src>
import functools

import jax
import jax.numpy as jnp
from jax.experimental import pallas as pl
from jax.experimental.pallas import tpu as pltpu


def _round_up(x, m):
    return ((x + m - 1) // m) * m


def _make_mh_vq_kernel(head_dims, head_kp, scales):
    """Build the fused multi-head VQ kernel for a static head configuration."""
    n_heads = len(head_dims)
    col_off = [0]
    for kp in head_kp:
        col_off.append(col_off[-1] + kp)
    kp_sum = col_off[-1]

    def kernel(x_ref, w_score_ref, n2_ref, w_deq_ref, q_ref, idx_ref):
        tn = x_ref.shape[0]
        x = x_ref[...]                                       # (tn, D_total) f32

        # Fused per-head scores with a single bf16 MXU pass against the
        # block-diagonal 2*E^T.  score_k = 2 x_h.e_k - ||e_k||^2 for the
        # columns belonging to head h (foreign-head / padded columns have
        # zero weight; padded codes carry n2 = +inf so score = -inf).
        score = jnp.dot(x.astype(jnp.bfloat16), w_score_ref[...],
                        preferred_element_type=jnp.float32)  # (tn, kp_sum)
        score = score - n2_ref[...]

        iota = jax.lax.broadcasted_iota(jnp.int32, (tn, kp_sum), 1)
        onehot = jnp.zeros((tn, kp_sum), jnp.float32)
        combined = jnp.zeros((tn,), jnp.int32)
        for h in range(n_heads):
            lo, hi = col_off[h], col_off[h + 1]               # lane-aligned slice
            idx_h = jnp.argmax(score[:, lo:hi], axis=-1).astype(jnp.int32)
            combined = combined + idx_h * scales[h]
            onehot = onehot + (iota == (idx_h + lo)[:, None]).astype(jnp.float32)

        # Dequantize all heads at once: onehot @ block_diag(E) yields the
        # concatenated embedding rows exactly (f32, 0/1 weights, zero blocks).
        q_ref[...] = jnp.dot(onehot, w_deq_ref[...],
                             preferred_element_type=jnp.float32).astype(q_ref.dtype)
        # Lane-dense combined-index row (avoids masked single-lane stores).
        idx_ref[...] = combined.reshape(1, tn)

    return kernel


@functools.partial(jax.jit,
                   static_argnames=("head_dims", "head_kp", "scales", "row_tile"))
def _mh_vq(x_flat, w_score, n2, w_deq, *, head_dims, head_kp, scales, row_tile):
    """x_flat: (N, sum(head_dims)) f32 -> (quant (N, D) f32, index (N,) int32)."""
    n, d_total = x_flat.shape

    # Row tile: multiple of 128 for large N (MXU/lane friendly); for small N a
    # single padded tile.  No divisibility requirement on N (pad instead).
    n8 = _round_up(max(n, 8), 8)
    tn = _round_up(row_tile, 128)
    if n8 <= tn:
        tn = n8
    num_tiles = (n + tn - 1) // tn
    n_pad = num_tiles * tn
    if n_pad != n:
        x_flat = jnp.pad(x_flat, ((0, n_pad - n), (0, 0)))

    kernel = _make_mh_vq_kernel(head_dims, head_kp, scales)

    in_specs = [
        pl.BlockSpec((tn, d_total), lambda i: (i, 0)),        # row tile of x
        # Weight / norm operands: full block, constant index_map -> kept
        # resident in VMEM across grid steps (no per-step re-DMA).
        pl.BlockSpec(w_score.shape, lambda i: (0, 0)),
        pl.BlockSpec(n2.shape, lambda i: (0, 0)),
        pl.BlockSpec(w_deq.shape, lambda i: (0, 0)),
    ]
    out_specs = [
        pl.BlockSpec((tn, d_total), lambda i: (i, 0)),        # quantized rows
        pl.BlockSpec((1, tn), lambda i: (0, i)),              # combined index
    ]
    out_shape = (
        jax.ShapeDtypeStruct((n_pad, d_total), jnp.float32),
        jax.ShapeDtypeStruct((1, n_pad), jnp.int32),
    )

    quant_pad, idx_pad = pl.pallas_call(
        kernel,
        out_shape=out_shape,
        grid_spec=pltpu.PrefetchScalarGridSpec(
            num_scalar_prefetch=0,
            grid=(num_tiles,),
            in_specs=in_specs,
            out_specs=out_specs,
        ),
        compiler_params=pltpu.CompilerParams(
            dimension_semantics=("parallel",),   # rows shard across TensorCores
            vmem_limit_bytes=32 * 1024 * 1024,
        ),
    )(x_flat, w_score, n2, w_deq)

    return quant_pad[:n], idx_pad[0, :n]


class MultiHeadEuclideanCodebookPallas:
    """Inference-only forward of MultiHeadEuclideanCodebook
    (method='product', n_groups=1)."""

    def __init__(self, codebook_dims, codebook_sizes, key, row_tile=512):
        assert len(codebook_dims) == len(codebook_sizes)
        self.codebook_dims = list(codebook_dims)
        self.codebook_sizes = list(codebook_sizes)
        self.d_total = sum(codebook_dims)
        self.row_tile = int(row_tile)   # sweep 512-2048 for production shapes

        # _integrate (n_groups == 1): scales = cumprod([1] + sizes[:-1])
        self.scales = [1]
        for s in self.codebook_sizes[:-1]:
            self.scales.append(self.scales[-1] * s)

        self.embeds = []                 # (K, d) f32 reference codebooks
        score_blocks, deq_blocks, n2_parts, head_kp = [], [], [], []
        for d, k in zip(self.codebook_dims, self.codebook_sizes):
            key, sub = jax.random.split(key)
            # kaiming_uniform_-style bound: sqrt(2) * sqrt(3 / fan_in)
            bound = (2.0 ** 0.5) * (3.0 / d) ** 0.5
            e = jax.random.uniform(sub, (k, d), jnp.float32, -bound, bound)
            self.embeds.append(e)

            kp = _round_up(k, 128)                       # fill MXU / lane tile
            head_kp.append(kp)
            e_pad = jnp.pad(e, ((0, kp - k), (0, 0)))    # (kp, d)
            score_blocks.append((2.0 * e_pad).T)         # (d, kp), 2x is exact
            deq_blocks.append(e_pad)                     # (kp, d) f32 exact lookup
            n2 = jnp.sum(e * e, axis=1)
            n2_parts.append(jnp.concatenate(
                [n2, jnp.full((kp - k,), jnp.inf, jnp.float32)]))

        self.head_kp = tuple(head_kp)
        kp_sum = sum(head_kp)

        # Assemble block-diagonal weights once at init.
        w_score = jnp.zeros((self.d_total, kp_sum), jnp.float32)
        w_deq = jnp.zeros((kp_sum, self.d_total), jnp.float32)
        r = c = 0
        for h, (d, kp) in enumerate(zip(self.codebook_dims, head_kp)):
            w_score = w_score.at[r:r + d, c:c + kp].set(score_blocks[h])
            w_deq = w_deq.at[c:c + kp, r:r + d].set(deq_blocks[h])
            r += d
            c += kp

        self._w_score = w_score.astype(jnp.bfloat16)     # bf16 score matmul
        self._w_deq = w_deq                              # f32 exact dequant
        self._n2 = jnp.concatenate(n2_parts)[None, :]    # (1, kp_sum) f32

    def __call__(self, x, x_len=None):
        """x: (B, T, sum(codebook_dims)) f32
        returns (quant (B,T,D) f32, loss scalar, index (B,T) int32)."""
        b, t, d = x.shape
        assert d == self.d_total
        q_flat, idx_flat = _mh_vq(
            x.reshape(b * t, d), self._w_score, self._n2, self._w_deq,
            head_dims=tuple(self.codebook_dims),
            head_kp=self.head_kp,
            scales=tuple(self.scales),
            row_tile=self.row_tile)
        quant = q_flat.reshape(b, t, d)
        index = idx_flat.reshape(b, t)
        loss = jnp.zeros((), jnp.float32)   # eval-mode commit loss == 0
        return quant, loss, index


if __name__ == "__main__":
    key = jax.random.PRNGKey(0)
    B, T = 2, 8
    codebook_dims = [32, 32]
    codebook_sizes = [16, 16]

    key, k_mod, k_x = jax.random.split(key, 3)
    module = MultiHeadEuclideanCodebookPallas(codebook_dims, codebook_sizes, k_mod)
    x = jax.random.normal(k_x, (B, T, sum(codebook_dims)), jnp.float32)
    x_len = jnp.full((B,), T, jnp.int32)  # unused in eval forward

    quant, loss, index = module(x, x_len)
    jax.block_until_ready((quant, loss, index))

    # Pure-JAX reference (same bf16 cross-term as the kernel so the argmax is
    # deterministic-identical; dequantize is the exact f32 embedding lookup).
    def ref_forward(xin, mod):
        b, t, _ = xin.shape
        offs = [0]
        for d in mod.codebook_dims:
            offs.append(offs[-1] + d)
        quants, idxs = [], []
        for h, embed in enumerate(mod.embeds):
            chunk = xin[..., offs[h]:offs[h + 1]].reshape(-1, mod.codebook_dims[h])
            xe = jnp.dot(chunk.astype(jnp.bfloat16),
                         embed.astype(jnp.bfloat16).T,
                         preferred_element_type=jnp.float32)
            score = 2.0 * xe - jnp.sum(embed * embed, axis=1)[None, :]
            idx = jnp.argmax(score, axis=-1).astype(jnp.int32)
            quants.append(embed[idx].reshape(b, t, -1))
            idxs.append(idx.reshape(b, t))
        q = jnp.concatenate(quants, axis=-1)
        ind = sum(i * s for i, s in zip(idxs, mod.scales))
        return q, ind

    q_ref, i_ref = ref_forward(x, module)
    assert quant.shape == (B, T, sum(codebook_dims))
    assert index.shape == (B, T)
    assert jnp.allclose(quant, q_ref, rtol=1e-4, atol=1e-5), "quantize mismatch"
    assert jnp.array_equal(index, i_ref), "index mismatch"
    assert float(loss) == 0.0

    # Exercise the non-divisible-N / padding path (no tile-divisibility assert).
    x2 = jax.random.normal(jax.random.PRNGKey(1),
                           (2, 5, sum(codebook_dims)), jnp.float32)
    q2, l2, i2 = module(x2)
    jax.block_until_ready((q2, l2, i2))
    q2_ref, i2_ref = ref_forward(x2, module)
    assert jnp.allclose(q2, q2_ref, rtol=1e-4, atol=1e-5), "padded quantize mismatch"
    assert jnp.array_equal(i2, i2_ref), "padded index mismatch"

    print("KERNEL_OK")
</pallas_src>

<mosaic_0001>
module attributes {stable_mosaic.version = 11 : i64} {
  func.func @kernel(%arg0: i32, %arg1: memref<16x64xf32, #tpu.memory_space<vmem>>, %arg2: memref<64x256xbf16, #tpu.memory_space<vmem>>, %arg3: memref<1x256xf32, #tpu.memory_space<vmem>>, %arg4: memref<256x64xf32, #tpu.memory_space<vmem>>, %arg5: memref<16x64xf32, #tpu.memory_space<vmem>>, %arg6: memref<1x16xi32, #tpu.memory_space<vmem>>) attributes {dimension_semantics = [#tpu.dimension_semantics<parallel>], iteration_bounds = array<i64: 1>, scalar_prefetch = 0 : i64, scratch_operands = 0 : i64, tpu.core_type = #tpu.core_type<tc>, window_params = [{transform_indices = @transform_0, window_bounds = array<i64: 16, 64>}, {pipeline_mode = #tpu.pipeline_mode<synchronous>, transform_indices = @transform_1, window_bounds = array<i64: 64, 256>}, {pipeline_mode = #tpu.pipeline_mode<synchronous>, transform_indices = @transform_2, window_bounds = array<i64: 1, 256>}, {pipeline_mode = #tpu.pipeline_mode<synchronous>, transform_indices = @transform_3, window_bounds = array<i64: 256, 64>}, {transform_indices = @transform_4, window_bounds = array<i64: 16, 64>}, {transform_indices = @transform_5, window_bounds = array<i64: 1, 16>}]} {
    %c0 = arith.constant 0 : index
    %c0_0 = arith.constant 0 : index
    %0 = vector.load %arg1[%c0, %c0_0] : memref<16x64xf32, #tpu.memory_space<vmem>>, vector<16x64xf32>
    %1 = arith.truncf %0 : vector<16x64xf32> to vector<16x64xbf16>
    %c0_1 = arith.constant 0 : index
    %c0_2 = arith.constant 0 : index
    %2 = vector.load %arg2[%c0_1, %c0_2] : memref<64x256xbf16, #tpu.memory_space<vmem>>, vector<64x256xbf16>
    %cst = arith.constant dense<0.000000e+00> : vector<16x256xf32>
    %3 = tpu.matmul %1, %2, %cst {dimension_numbers = #tpu.dot_dimension_numbers<[1], [0], [0], [1], [0, 0, 1, 1], [], []>} : vector<16x64xbf16>, vector<64x256xbf16>, vector<16x256xf32> -> vector<16x256xf32>
    %c0_3 = arith.constant 0 : index
    %c0_4 = arith.constant 0 : index
    %4 = vector.load %arg3[%c0_3, %c0_4] : memref<1x256xf32, #tpu.memory_space<vmem>>, vector<1x256xf32>
    %5 = vector.broadcast %4 : vector<1x256xf32> to vector<16x256xf32>
    %6 = arith.subf %3, %5 : vector<16x256xf32>
    %7 = tpu.iota {dimensions = array<i32: 1>} : vector<16x256xi32>
    %cst_5 = arith.constant 0.000000e+00 : f32
    %8 = vector.broadcast %cst_5 : f32 to vector<16x256xf32>
    %c0_i32 = arith.constant 0 : i32
    %9 = vector.broadcast %c0_i32 : i32 to vector<16xi32>
    %10 = vector.extract_strided_slice %6 {offsets = [0, 0], sizes = [16, 128], strides = [1, 1]} : vector<16x256xf32> to vector<16x128xf32>
    %11 = tpu.reduce_index %10 {axis = 1 : i32, kind = #tpu.reduction_kind<arg_max>} : vector<16x128xf32> -> vector<16xi32>
    %c1_i32 = arith.constant 1 : i32
    %12 = vector.broadcast %c1_i32 : i32 to vector<16xi32>
    %13 = arith.muli %11, %12 : vector<16xi32>
    %14 = arith.addi %9, %13 : vector<16xi32>
    %c0_i32_6 = arith.constant 0 : i32
    %15 = vector.broadcast %c0_i32_6 : i32 to vector<16xi32>
    %16 = arith.addi %11, %15 : vector<16xi32>
    %17 = vector.shape_cast %16 : vector<16xi32> to vector<16x1xi32>
    %18 = vector.broadcast %17 : vector<16x1xi32> to vector<16x256xi32>
    %19 = arith.cmpi eq, %7, %18 : vector<16x256xi32>
    %20 = arith.extui %19 : vector<16x256xi1> to vector<16x256xi32>
    %21 = arith.sitofp %20 : vector<16x256xi32> to vector<16x256xf32>
    %22 = arith.addf %8, %21 : vector<16x256xf32>
    %23 = vector.extract_strided_slice %6 {offsets = [0, 128], sizes = [16, 128], strides = [1, 1]} : vector<16x256xf32> to vector<16x128xf32>
    %24 = tpu.reduce_index %23 {axis = 1 : i32, kind = #tpu.reduction_kind<arg_max>} : vector<16x128xf32> -> vector<16xi32>
    %c16_i32 = arith.constant 16 : i32
    %25 = vector.broadcast %c16_i32 : i32 to vector<16xi32>
    %26 = arith.muli %24, %25 : vector<16xi32>
    %27 = arith.addi %14, %26 : vector<16xi32>
    %c128_i32 = arith.constant 128 : i32
    %28 = vector.broadcast %c128_i32 : i32 to vector<16xi32>
    %29 = arith.addi %24, %28 : vector<16xi32>
    %30 = vector.shape_cast %29 : vector<16xi32> to vector<16x1xi32>
    %31 = vector.broadcast %30 : vector<16x1xi32> to vector<16x256xi32>
    %32 = arith.cmpi eq, %7, %31 : vector<16x256xi32>
    %33 = arith.extui %32 : vector<16x256xi1> to vector<16x256xi32>
    %34 = arith.sitofp %33 : vector<16x256xi32> to vector<16x256xf32>
    %35 = arith.addf %22, %34 : vector<16x256xf32>
    %c0_7 = arith.constant 0 : index
    %c0_8 = arith.constant 0 : index
    %36 = vector.load %arg4[%c0_7, %c0_8] : memref<256x64xf32, #tpu.memory_space<vmem>>, vector<256x64xf32>
    %cst_9 = arith.constant dense<0.000000e+00> : vector<16x64xf32>
    %37 = tpu.matmul %35, %36, %cst_9 {dimension_numbers = #tpu.dot_dimension_numbers<[1], [0], [0], [1], [0, 0, 1, 1], [], []>} : vector<16x256xf32>, vector<256x64xf32>, vector<16x64xf32> -> vector<16x64xf32>
    %c0_10 = arith.constant 0 : index
    %c0_11 = arith.constant 0 : index
    %38 = vector.load %arg5[%c0_10, %c0_11] : memref<16x64xf32, #tpu.memory_space<vmem>>, vector<16x64xf32>
    tpu.vector_store %arg5[%c0_10, %c0_11], %37 {strides = array<i32>} : memref<16x64xf32, #tpu.memory_space<vmem>>, vector<16x64xf32>,
    %39 = vector.shape_cast %27 : vector<16xi32> to vector<1x16xi32>
    %c0_12 = arith.constant 0 : index
    %c0_13 = arith.constant 0 : index
    %40 = vector.load %arg6[%c0_12, %c0_13] : memref<1x16xi32, #tpu.memory_space<vmem>>, vector<1x16xi32>
    tpu.vector_store %arg6[%c0_12, %c0_13], %39 {strides = array<i32>} : memref<1x16xi32, #tpu.memory_space<vmem>>, vector<1x16xi32>,
    return
  }
  func.func @transform_0(%arg0: i32) -> (i32, i32) {
    %c0_i32 = arith.constant 0 : i32
    %c0_i32_0 = arith.constant 0 : i32
    return %arg0, %c0_i32 : i32, i32
  }
  func.func @transform_1(%arg0: i32) -> (i32, i32) {
    %c0_i32 = arith.constant 0 : i32
    %c0_i32_0 = arith.constant 0 : i32
    %c0_i32_1 = arith.constant 0 : i32
    return %c0_i32, %c0_i32_0 : i32, i32
  }
  func.func @transform_2(%arg0: i32) -> (i32, i32) {
    %c0_i32 = arith.constant 0 : i32
    %c0_i32_0 = arith.constant 0 : i32
    %c0_i32_1 = arith.constant 0 : i32
    return %c0_i32, %c0_i32_0 : i32, i32
  }
  func.func @transform_3(%arg0: i32) -> (i32, i32) {
    %c0_i32 = arith.constant 0 : i32
    %c0_i32_0 = arith.constant 0 : i32
    %c0_i32_1 = arith.constant 0 : i32
    return %c0_i32, %c0_i32_0 : i32, i32
  }
  func.func @transform_4(%arg0: i32) -> (i32, i32) {
    %c0_i32 = arith.constant 0 : i32
    %c0_i32_0 = arith.constant 0 : i32
    return %arg0, %c0_i32 : i32, i32
  }
  func.func @transform_5(%arg0: i32) -> (i32, i32) {
    %c0_i32 = arith.constant 0 : i32
    %c0_i32_0 = arith.constant 0 : i32
    return %c0_i32, %arg0 : i32, i32
  }
}

</mosaic_0001>

<llo_original>
// kernel: _mh_vq.1
$region0: #{_mh_vq.1}
  #allocation0 [shape = 'u32[]', space=smem, size = 0x4, offset = 0x4, fixed_abs, tag = 'smem constant byte address 0x4 - core index']
  #allocation1 [shape = 'u32[144,128]{1,0:T(1,128)}', space=vmem, size = 0x12000, scoped, tag = 'internal scratch']
  %s0 = inlined_call_operand.vmem [shape: f32[16,64], index: 0, kind: input, shape index: {}]
  %s1 = inlined_call_operand.vmem [shape: bf16[64,256], index: 1, kind: input, shape index: {}]
  %s2 = inlined_call_operand.vmem [shape: f32[1,256], index: 2, kind: input, shape index: {}]
  %s3 = inlined_call_operand.vmem [shape: f32[256,64], index: 3, kind: input, shape index: {}]
  %s4 = inlined_call_operand.hbm [shape: f32[16,64], index: 4, kind: output, shape index: {0}]
  %s5 = inlined_call_operand.hbm [shape: s32[1,16], index: 5, kind: output, shape index: {1}]
  %6 = xla_tuple %s4, %s5
  %s7 = sld [smem:[#allocation0]]
  $region34: #{_mh_vq.1} parent=0
    _
  %s9 = ssub.s32 1, %s7
  %s10 = scalar_select 0, %s9, %s7
  $region1: #{_mh_vq.1} parent=0
    #allocation2 [shape = 'u8[8192]{0}', space=vmem, size = 0x2000, scoped, tag = 'output window, operand 0, single buffered']
    #allocation3 [shape = 's32[1]{0}', space=sflag, size = 0x4, scoped, tag = 'scoped memory for _mh_vq.1']
    #allocation4 [shape = 'u8[512]{0}', space=vmem, size = 0x400, scoped, tag = 'output window, operand 1, single buffered']
    #allocation5 [shape = 's32[1]{0}', space=sflag, size = 0x4, scoped, tag = 'scoped memory for _mh_vq.1']
    %11 = vsyncpa [#allocation3], 0
    %12 = vsyncpa [#allocation5], 0
    // Predicated region
    $region2: #{_mh_vq.1} parent=1 // pred_check
      _
    $region3: #{_mh_vq.1} parent=1 // pred_check_branch
      %14 = sbr.rel (0) target = $region5
    $region4: #{_mh_vq.1} parent=1 // pred_region
      _
    $region5: #{_mh_vq.1} parent=1 // pred_fallthru
      _
    // Predicated region
    $region6: #{_mh_vq.1} parent=1 // pred_check
      _
    $region7: #{_mh_vq.1} parent=1 // pred_check_branch
      %16 = sbr.rel (0) target = $region9
    $region8: #{_mh_vq.1} parent=1 // pred_region
      _
    $region9: #{_mh_vq.1} parent=1 // pred_fallthru
      _
    // Predicated region
    $region10: #{_mh_vq.1} parent=1 // pred_check
      _
    $region11: #{_mh_vq.1} parent=1 // pred_check_branch
      %18 = sbr.rel (0) target = $region13
    $region12: #{_mh_vq.1} parent=1 // pred_region
      _
    $region13: #{_mh_vq.1} parent=1 // pred_fallthru
      _
    // Predicated region
    $region14: #{_mh_vq.1} parent=1 // pred_check
      _
    $region15: #{_mh_vq.1} parent=1 // pred_check_branch
      %20 = sbr.rel (0) target = $region17
    $region16: #{_mh_vq.1} parent=1 // pred_region
      _
    $region17: #{_mh_vq.1} parent=1 // pred_fallthru
      _
    %v22 = vld [vmem:[%s0] sm:$0xff]
    %v23 = vld [vmem:[%s0 + $0x8] sm:$0xff]
    %v24 = vpack.c.bf16 %v23, %v22
    %v25 = vld [vmem:[%s1] sm:$0xff]
    %v26 = vld [vmem:[%s1 + $0x8] sm:$0xff]
    %v27 = vld [vmem:[%s1 + $0x10] sm:$0xff]
    %v28 = vld [vmem:[%s1 + $0x18] sm:$0xff]
    %v29 = vld [vmem:[%s1 + $0x20] sm:$0xff]
    %v30 = vld [vmem:[%s1 + $0x28] sm:$0xff]
    %v31 = vld [vmem:[%s1 + $0x30] sm:$0xff]
    %v32 = vld [vmem:[%s1 + $0x38] sm:$0xff]
    %v41 = vunpack.c.l.b16 %v25
    %v42 = vunpack.c.h.b16 %v25
    %v43 = vunpack.c.l.b16 %v26
    %v44 = vunpack.c.h.b16 %v26
    %v45 = vunpack.c.l.b16 %v27
    %v46 = vunpack.c.h.b16 %v27
    %v47 = vunpack.c.l.b16 %v28
    %v48 = vunpack.c.h.b16 %v28
    %v49 = vunpack.c.l.b16 %v29
    %v50 = vunpack.c.h.b16 %v29
    %v51 = vunpack.c.l.b16 %v30
    %v52 = vunpack.c.h.b16 %v30
    %v53 = vunpack.c.l.b16 %v31
    %v54 = vunpack.c.h.b16 %v31
    %v55 = vunpack.c.l.b16 %v32
    %v56 = vunpack.c.h.b16 %v32
    %v57 = vpack.c.b16 %v43, %v41
    %v58 = vpack.c.b16 %v44, %v42
    %v59 = vpack.c.b16 %v47, %v45
    %v60 = vpack.c.b16 %v48, %v46
    %v61 = vpack.c.b16 %v51, %v49
    %v62 = vpack.c.b16 %v52, %v50
    %v63 = vpack.c.b16 %v55, %v53
    %v64 = vpack.c.b16 %v56, %v54
    %vm73 = vcmask 523264
    %v75 = vsel %vm73, %v24, 0
    %77 = vmatprep.subr.bf16.mxu0 %v58
    %78 = vmatpush1.bf16.msra.mxu0 %v57
    %79 = vmatprep.subr.bf16.mxu0 %v60
    %80 = vmatpush1.bf16.msra.mxu0 %v59
    %81 = vmatprep.subr.bf16.mxu0 %v62
    %82 = vmatpush1.bf16.msra.mxu0 %v61
    %83 = vmatprep.subr.bf16.mxu0 %v64
    %84 = vmatpush1.bf16.msra.mxu0 %v63
    %85 = vmatprep.subr.bf16.mxu0 0
    %86 = vmatpush1.bf16.msra.mxu0 0
    %87 = vmatprep.subr.bf16.mxu0 0
    %88 = vmatpush1.bf16.msra.mxu0 0
    %89 = vmatprep.subr.bf16.mxu0 0
    %90 = vmatpush1.bf16.msra.mxu0 0
    %91 = vmatprep.subr.bf16.mxu0 0
    %92 = vmatpush1.bf16.msra.mxu0 0
    %93 = vmatprep.subr.bf16.mxu0 0
    %94 = vmatpush1.bf16.msra.mxu0 0
    %95 = vmatprep.subr.bf16.mxu0 0
    %96 = vmatpush1.bf16.msra.mxu0 0
    %97 = vmatprep.subr.bf16.mxu0 0
    %98 = vmatpush1.bf16.msra.mxu0 0
    %99 = vmatprep.subr.bf16.mxu0 0
    %100 = vmatpush1.bf16.msra.mxu0 0
    %101 = vmatprep.subr.bf16.mxu0 0
    %102 = vmatpush1.bf16.msra.mxu0 0
    %103 = vmatprep.subr.bf16.mxu0 0
    %104 = vmatpush1.bf16.msra.mxu0 0
    %105 = vmatprep.subr.bf16.mxu0 0
    %106 = vmatpush1.bf16.msra.mxu0 0
    %107 = vmatprep.subr.bf16.mxu0 0
    %108 = vmatpush1.bf16.msra.mxu0 0
    %109 = vmatprep.mubr.bf16.mxu0 0
    %110 = vmatmul.mubr.bf16.gmra.mrb[0].mxu0 %v75
    %v111 = vpop.f32.mrb[0].mxu0
    %v112 = vadd.f32 0.0, %v111
    %v113 = vpop.f32.mrb[0].mxu0
    %v114 = vadd.f32 0.0, %v113
    %v115 = vpop.f32.mrb[0].mxu0
    %v116 = vadd.f32 0.0, %v115
    %v117 = vpop.f32.mrb[0].mxu0
    %v118 = vadd.f32 0.0, %v117
    %119 = vdwg.mxu0
    %v120 = vld [vmem:[%s2] sm:$0x3]
    %v122 = vlaneseq
    %v123 = vshrl.u32 %v122, 7
    %v124 = vsub.s32 0, %v123
    %v125 = vrot.slane %v120, %v124
    %v126 = vlaneseq
    %v127 = vshrl.u32 %v126, 7
    %v128 = vsub.s32 1, %v127
    %v129 = vrot.slane %v120, %v128
    %v132 = vsub.f32 %v112, %v125
    %v133 = vsub.f32 %v114, %v129
    %v134 = vsub.f32 %v116, %v125
    %v135 = vsub.f32 %v118, %v129
    %v136 = vlaneseq
    %v137 = vand.u32 %v136, 127
    %v138 = vadd.s32 %v137, 128
    %139 = vmax.index.xlane.f32.xlu0 %v132
    %v140 = vpop.xlane.xlu0 %139
    %141 = vmax.index.xlane.f32.xlu0 %v134
    %v142 = vpop.xlane.xlu0 %141
    %vm143 = vcmp.eq.s32.totalorder %v137, %v140
    %vm144 = vcmp.eq.s32.totalorder %v138, %v140
    %vm145 = vcmp.eq.s32.totalorder %v137, %v142
    %vm146 = vcmp.eq.s32.totalorder %v138, %v142
    %v147 = vsel %vm143, 1, 0
    %v148 = vsel %vm144, 1, 0
    %v149 = vsel %vm145, 1, 0
    %v150 = vsel %vm146, 1, 0
    %v151 = vcvt.s32.f32 %v147
    %v152 = vcvt.s32.f32 %v148
    %v153 = vcvt.s32.f32 %v149
    %v154 = vcvt.s32.f32 %v150
    %v155 = vadd.f32 %v151, 0.0
    %v156 = vadd.f32 %v152, 0.0
    %v157 = vadd.f32 %v153, 0.0
    %v158 = vadd.f32 %v154, 0.0
    %159 = vmax.index.xlane.f32.xlu0 %v133
    %v160 = vpop.xlane.xlu0 %159
    %161 = vmax.index.xlane.f32.xlu0 %v135
    %v162 = vpop.xlane.xlu0 %161
    %v163 = vmul.u32 %v160, 16
    %v164 = vmul.u32 %v162, 16
    %v165 = vadd.s32 %v140, %v163
    %v166 = vadd.s32 %v142, %v164
    %v167 = vadd.s32 %v160, 128
    %v168 = vadd.s32 %v162, 128
    %vm169 = vcmp.eq.s32.totalorder %v137, %v167
    %vm170 = vcmp.eq.s32.totalorder %v138, %v167
    %vm171 = vcmp.eq.s32.totalorder %v137, %v168
    %vm172 = vcmp.eq.s32.totalorder %v138, %v168
    %v173 = vsel %vm169, 1, 0
    %v174 = vsel %vm170, 1, 0
    %v175 = vsel %vm171, 1, 0
    %v176 = vsel %vm172, 1, 0
    %v177 = vcvt.s32.f32 %v173
    %v178 = vcvt.s32.f32 %v174
    %v179 = vcvt.s32.f32 %v175
    %v180 = vcvt.s32.f32 %v176
    %v181 = vadd.f32 %v155, %v177
    %v182 = vadd.f32 %v156, %v178
    %v183 = vadd.f32 %v157, %v179
    %v184 = vadd.f32 %v158, %v180
    %v185 = vld [vmem:[%s3] sm:$0xff]
    %v186 = vld [vmem:[%s3 + $0x8] sm:$0xff]
    %v187 = vld [vmem:[%s3 + $0x10] sm:$0xff]
    %v188 = vld [vmem:[%s3 + $0x18] sm:$0xff]
    %v189 = vld [vmem:[%s3 + $0x20] sm:$0xff]
    %v190 = vld [vmem:[%s3 + $0x28] sm:$0xff]
    %v191 = vld [vmem:[%s3 + $0x30] sm:$0xff]
    %v192 = vld [vmem:[%s3 + $0x38] sm:$0xff]
    %v193 = vld [vmem:[%s3 + $0x40] sm:$0xff]
    %v194 = vld [vmem:[%s3 + $0x48] sm:$0xff]
    %v195 = vld [vmem:[%s3 + $0x50] sm:$0xff]
    %v196 = vld [vmem:[%s3 + $0x58] sm:$0xff]
    %v197 = vld [vmem:[%s3 + $0x60] sm:$0xff]
    %v198 = vld [vmem:[%s3 + $0x68] sm:$0xff]
    %v199 = vld [vmem:[%s3 + $0x70] sm:$0xff]
    %v200 = vld [vmem:[%s3 + $0x78] sm:$0xff]
    %v201 = vld [vmem:[%s3 + $0x80] sm:$0xff]
    %v202 = vld [vmem:[%s3 + $0x88] sm:$0xff]
    %v203 = vld [vmem:[%s3 + $0x90] sm:$0xff]
    %v204 = vld [vmem:[%s3 + $0x98] sm:$0xff]
    %v205 = vld [vmem:[%s3 + $0xa0] sm:$0xff]
    %v206 = vld [vmem:[%s3 + $0xa8] sm:$0xff]
    %v207 = vld [vmem:[%s3 + $0xb0] sm:$0xff]
    %v208 = vld [vmem:[%s3 + $0xb8] sm:$0xff]
    %v209 = vld [vmem:[%s3 + $0xc0] sm:$0xff]
    %v210 = vld [vmem:[%s3 + $0xc8] sm:$0xff]
    %v211 = vld [vmem:[%s3 + $0xd0] sm:$0xff]
    %v212 = vld [vmem:[%s3 + $0xd8] sm:$0xff]
    %v213 = vld [vmem:[%s3 + $0xe0] sm:$0xff]
    %v214 = vld [vmem:[%s3 + $0xe8] sm:$0xff]
    %v215 = vld [vmem:[%s3 + $0xf0] sm:$0xff]
    %v216 = vld [vmem:[%s3 + $0xf8] sm:$0xff]
    %217 = vmatprep.subr.mxu0 0.0
    %218 = vmatpush1.msra.mxu0 %v185
    %219 = vmatprep.subr.mxu0 0.0
    %220 = vmatpush1.msra.mxu0 %v186
    %221 = vmatprep.subr.mxu0 0.0
    %222 = vmatpush1.msra.mxu0 %v187
    %223 = vmatprep.subr.mxu0 0.0
    %224 = vmatpush1.msra.mxu0 %v188
    %225 = vmatprep.subr.mxu0 0.0
    %226 = vmatpush1.msra.mxu0 %v189
    %227 = vmatprep.subr.mxu0 0.0
    %228 = vmatpush1.msra.mxu0 %v190
    %229 = vmatprep.subr.mxu0 0.0
    %230 = vmatpush1.msra.mxu0 %v191
    %231 = vmatprep.subr.mxu0 0.0
    %232 = vmatpush1.msra.mxu0 %v192
    %233 = vmatprep.subr.mxu0 0.0
    %234 = vmatpush1.msra.mxu0 %v193
    %235 = vmatprep.subr.mxu0 0.0
    %236 = vmatpush1.msra.mxu0 %v194
    %237 = vmatprep.subr.mxu0 0.0
    %238 = vmatpush1.msra.mxu0 %v195
    %239 = vmatprep.subr.mxu0 0.0
    %240 = vmatpush1.msra.mxu0 %v196
    %241 = vmatprep.subr.mxu0 0.0
    %242 = vmatpush1.msra.mxu0 %v197
    %243 = vmatprep.subr.mxu0 0.0
    %244 = vmatpush1.msra.mxu0 %v198
    %245 = vmatprep.subr.mxu0 0.0
    %246 = vmatpush1.msra.mxu0 %v199
    %247 = vmatprep.subr.mxu0 0.0
    %248 = vmatpush1.msra.mxu0 %v200
    %249 = vmatprep.subr.mxu0 0.0
    %250 = vmatpush1.msra.mxu0 %v201
    %251 = vmatprep.subr.mxu0 0.0
    %252 = vmatpush1.msra.mxu0 %v202
    %253 = vmatprep.subr.mxu0 0.0
    %254 = vmatpush1.msra.mxu0 %v203
    %255 = vmatprep.subr.mxu0 0.0
    %256 = vmatpush1.msra.mxu0 %v204
    %257 = vmatprep.subr.mxu0 0.0
    %258 = vmatpush1.msra.mxu0 %v205
    %259 = vmatprep.subr.mxu0 0.0
    %260 = vmatpush1.msra.mxu0 %v206
    %261 = vmatprep.subr.mxu0 0.0
    %262 = vmatpush1.msra.mxu0 %v207
    %263 = vmatprep.subr.mxu0 0.0
    %264 = vmatpush1.msra.mxu0 %v208
    %265 = vmatprep.subr.mxu0 0.0
    %266 = vmatpush1.msra.mxu0 %v209
    %267 = vmatprep.subr.mxu0 0.0
    %268 = vmatpush1.msra.mxu0 %v210
    %269 = vmatprep.subr.mxu0 0.0
    %270 = vmatpush1.msra.mxu0 %v211
    %271 = vmatprep.subr.mxu0 0.0
    %272 = vmatpush1.msra.mxu0 %v212
    %273 = vmatprep.subr.mxu0 0.0
    %274 = vmatpush1.msra.mxu0 %v213
    %275 = vmatprep.subr.mxu0 0.0
    %276 = vmatpush1.msra.mxu0 %v214
    %277 = vmatprep.subr.mxu0 0.0
    %278 = vmatpush1.msra.mxu0 %v215
    %279 = vmatprep.subr.mxu0 0.0
    %280 = vmatpush1.msra.mxu0 %v216
    %281 = vmatprep.mubr.f32.mxu0 %v182
    %282 = vmatmul.mubr.f32.gmra.mrb[0].mxu0 %v181
    %v283 = vpop.f32.mrb[0].mxu0
    %v284 = vadd.f32 0.0, %v283
    %v285 = vpop.f32.mrb[0].mxu0
    %286 = vmatprep.mubr.f32.mxu0 %v184
    %287 = vmatmul.mubr.f32.gmra.mrb[0].mxu0 %v183
    %v288 = vpop.f32.mrb[0].mxu0
    %v289 = vadd.f32 0.0, %v288
    %v290 = vpop.f32.mrb[0].mxu0
    %291 = vdwg.mxu0
    %292 = vst.msk [vmem:[#allocation2] sm:$0xff] %vm73, %v284
    %293 = vst.msk [vmem:[#allocation2 + $0x8] sm:$0xff] %vm73, %v289
    %v294 = vlaneseq
    %v295 = vshrl.u32 %v294, 7
    %v296 = vsub.s32 %v137, %v295
    %v297 = vrot.slane %v165, %v296
    %v298 = vadd.s32 %v137, 4294967288
    %v299 = vlaneseq
    %v300 = vshrl.u32 %v299, 7
    %v301 = vsub.s32 %v298, %v300
    %v302 = vrot.slane %v166, %v301
    %vm303 = vcmask 130112
    %v304 = vsel %vm303, %v302, %v297
    %vm305 = vcmask 122880
    %306 = vst.msk [vmem:[#allocation4] sm:$0x1] %vm305, %v304
    // Predicated region
    $region18: #{_mh_vq.1} parent=1 // pred_check
      _
    $region19: #{_mh_vq.1} parent=1 // pred_check_branch
      %308 = sbr.rel (0) target = $region21
    $region20: #{_mh_vq.1} parent=1 // pred_region
      %s310 = ssub.s32 256, 256
      %311 = vsyncadd [#allocation3], %s310
      %s312 = sshll.u32 [#allocation2], 4
      %s313 = int_to_ptr.vmem [resolvable:$true] %s312
      %318 = dma.vmem_to_hbm [thread:$0]  %s313, 256, %s4, [#allocation3], 128, 128, 8
    $region21: #{_mh_vq.1} parent=1 // pred_fallthru
      _
    // Predicated region
    $region22: #{_mh_vq.1} parent=1 // pred_check
      _
    $region23: #{_mh_vq.1} parent=1 // pred_check_branch
      %320 = sbr.rel (0) target = $region25
    $region24: #{_mh_vq.1} parent=1 // pred_region
      %s322 = ssub.s32 16, 16
      %323 = vsyncadd [#allocation5], %s322
      %s325 = sshll.u32 [#allocation4], 4
      %s326 = int_to_ptr.vmem [resolvable:$true] %s325
      %328 = dma.vmem_to_hbm [thread:$0]  %s326, 16, %s5, [#allocation5]
    $region25: #{_mh_vq.1} parent=1 // pred_fallthru
      _
    // Predicated region
    $region26: #{_mh_vq.1} parent=1 // pred_check
      _
    $region27: #{_mh_vq.1} parent=1 // pred_check_branch
      %330 = sbr.rel (0) target = $region29
    $region28: #{_mh_vq.1} parent=1 // pred_region
      %331 = dma.done [#allocation3], 256
    $region29: #{_mh_vq.1} parent=1 // pred_fallthru
      _
    // Predicated region
    $region30: #{_mh_vq.1} parent=1 // pred_check
      _
    $region31: #{_mh_vq.1} parent=1 // pred_check_branch
      %333 = sbr.rel (0) target = $region33
    $region32: #{_mh_vq.1} parent=1 // pred_region
      %334 = dma.done [#allocation5], 16
    $region33: #{_mh_vq.1} parent=1 // pred_fallthru
      _
    %335 = vsyncpa [#allocation3], 1
    %336 = vsyncpa [#allocation5], 1

</llo_original>
